<compile_context>
chip_gen: v6e
topology: v6e:2x2x1
jax: 0.10.0
libtpu: 0.0.40
codegen_flags: <defaults>
</compile_context>

<pallas_src>
import math
from functools import partial

import jax
import jax.numpy as jnp
from jax.experimental import pallas as pl
from jax.experimental.pallas import tpu as pltpu


# ---------------------------------------------------------------------------
# Shared helper: gate = sigmoid(mlp(avg) + mlp(max)), MLP evaluated once on
# the stacked (C, 2) matrix [avg | max]. ReLU acts per column so stacking is
# exact, and the row-sum reproduces mlp(avg) + mlp(max).
# ---------------------------------------------------------------------------
def _mlp_gate(avg, mx, w1_ref, b1_ref, w2_ref, b2_ref):
    C = avg.shape[0]
    col = jax.lax.broadcasted_iota(jnp.int32, (C, 2), 1)
    v = jnp.where(col == 0, avg, mx)                             # (C, 2)

    w1 = w1_ref[...].astype(jnp.float32)                         # (Ch, C)
    b1 = b1_ref[...].astype(jnp.float32)                         # (Ch, 1)
    w2 = w2_ref[...].astype(jnp.float32)                         # (C, Ch)
    b2 = b2_ref[...].astype(jnp.float32)                         # (C, 1)

    h = jnp.dot(w1, v, preferred_element_type=jnp.float32) + b1  # (Ch, 2)
    h = jnp.maximum(h, 0.0)
    y = jnp.dot(w2, h, preferred_element_type=jnp.float32) + b2  # (C, 2)
    return jax.nn.sigmoid(jnp.sum(y, axis=1, keepdims=True))     # (C, 1)


# ---------------------------------------------------------------------------
# Fused single-pass kernel: one grid step per batch element.
# ---------------------------------------------------------------------------
def _fused_kernel(hw, x_ref, w1_ref, b1_ref, w2_ref, b2_ref, o_ref):
    """x_ref/o_ref: (C, HW); weights as in _mlp_gate."""
    x = x_ref[...].astype(jnp.float32)                           # (C, HW)
    avg = jnp.sum(x, axis=-1, keepdims=True) * jnp.float32(1.0 / hw)
    mx = jnp.max(x, axis=-1, keepdims=True)
    gate = _mlp_gate(avg, mx, w1_ref, b1_ref, w2_ref, b2_ref)    # (C, 1) f32
    o_ref[...] = (x * gate).astype(o_ref.dtype)


# ---------------------------------------------------------------------------
# Two-pass kernels (large inputs): tiled pooling+gate, then gated multiply.
# ---------------------------------------------------------------------------
def _pool_gate_kernel(hw, hw_tile, needs_mask,
                      x_ref, w1_ref, b1_ref, w2_ref, b2_ref, attn_ref,
                      sum_acc, max_acc):
    """Pass 1: per-batch spatial sum/max reduction + shared MLP gate.

    x_ref:    (C, HW_TILE)  one spatial tile of one batch element
    attn_ref: (C, 1)        sigmoid gate output (written at last tile)
    sum_acc / max_acc: (C, 1) f32 scratch accumulators
    """
    t = pl.program_id(1)

    @pl.when(t == 0)
    def _init():
        sum_acc[...] = jnp.zeros_like(sum_acc)
        max_acc[...] = jnp.full_like(max_acc, -jnp.inf)

    x = x_ref[...].astype(jnp.float32)                           # (C, HW_TILE)
    if needs_mask:
        col = jax.lax.broadcasted_iota(jnp.int32, x.shape, 1) + t * hw_tile
        valid = col < hw
        xs = jnp.where(valid, x, 0.0)
        xm = jnp.where(valid, x, -jnp.inf)
    else:
        xs = x
        xm = x

    sum_acc[...] += jnp.sum(xs, axis=-1, keepdims=True)          # (C, 1)
    max_acc[...] = jnp.maximum(max_acc[...],
                               jnp.max(xm, axis=-1, keepdims=True))

    @pl.when(t == pl.num_programs(1) - 1)
    def _finalize():
        avg = sum_acc[...] * jnp.float32(1.0 / hw)
        gate = _mlp_gate(avg, max_acc[...], w1_ref, b1_ref, w2_ref, b2_ref)
        attn_ref[...] = gate.astype(attn_ref.dtype)


def _apply_gate_kernel(x_ref, attn_ref, o_ref):
    """Pass 2: out = x * gate, gate broadcast along the spatial (lane) axis."""
    gate = attn_ref[...].astype(x_ref.dtype)                     # (C, 1)
    o_ref[...] = (x_ref[...] * gate).astype(o_ref.dtype)


# ---------------------------------------------------------------------------
# Wrapper
# ---------------------------------------------------------------------------
_FUSED_F32_BYTES_LIMIT = 4 * 1024 * 1024  # per-batch f32 working set cap


def channel_attention(x_nchw, w1, b1, w2, b2, *,
                      hw_tile=None, force_two_pass=False):
    """x_nchw: [B, C, H, W]; w1: [Ch, C]; b1: [Ch, 1]; w2: [C, Ch]; b2: [C, 1]."""
    B, C, H, W = x_nchw.shape
    HW = H * W
    Ch = w1.shape[0]

    # NCHW -> [B, C, HW]: contiguous reshape, no data movement / transpose.
    x = x_nchw.reshape(B, C, HW)
    vmem_params = dict(vmem_limit_bytes=32 * 1024 * 1024)

    fused_ok = (not force_two_pass) and (C * HW * 4 <= _FUSED_F32_BYTES_LIMIT)

    if fused_ok:
        # ---- Fused single pass: x read from HBM exactly once ---------------
        out = pl.pallas_call(
            partial(_fused_kernel, HW),
            out_shape=jax.ShapeDtypeStruct((B, C, HW), x.dtype),
            grid_spec=pltpu.PrefetchScalarGridSpec(
                num_scalar_prefetch=0,
                grid=(B,),
                in_specs=[
                    pl.BlockSpec((pl.Squeezed(), C, HW), lambda b: (b, 0, 0)),
                    pl.BlockSpec((Ch, C), lambda b: (0, 0)),
                    pl.BlockSpec((Ch, 1), lambda b: (0, 0)),
                    pl.BlockSpec((C, Ch), lambda b: (0, 0)),
                    pl.BlockSpec((C, 1), lambda b: (0, 0)),
                ],
                out_specs=pl.BlockSpec((pl.Squeezed(), C, HW),
                                       lambda b: (b, 0, 0)),
            ),
            compiler_params=pltpu.CompilerParams(
                dimension_semantics=("parallel",), **vmem_params
            ),
        )(x, w1, b1, w2, b2)
        return out.reshape(B, C, H, W)

    # ---- Two-pass path ------------------------------------------------------
    if hw_tile is None:
        if HW % 128 == 0:
            itemsize = jnp.dtype(x_nchw.dtype).itemsize
            # Keep each (C, hw_tile) buffer around <= 2 MiB (fits v7x's VMEM
            # comfortably with double buffering), multiple of 128 lanes.
            cap = max(128, (2 * 1024 * 1024 // max(1, C * itemsize)) // 128 * 128)
            hw_tile = min(HW, 2048, cap)
        else:
            hw_tile = HW  # full-extent block (satisfies the (8,128) rule)
    assert hw_tile == HW or hw_tile % 128 == 0

    n_tiles = pl.cdiv(HW, hw_tile)
    needs_mask = (HW % hw_tile) != 0

    # ---- Pass 1: pooled statistics -> sigmoid gate, shape (B, C, 1) ---------
    attn = pl.pallas_call(
        partial(_pool_gate_kernel, HW, hw_tile, needs_mask),
        out_shape=jax.ShapeDtypeStruct((B, C, 1), jnp.float32),
        grid_spec=pltpu.PrefetchScalarGridSpec(
            num_scalar_prefetch=0,
            grid=(B, n_tiles),
            in_specs=[
                pl.BlockSpec((pl.Squeezed(), C, hw_tile), lambda b, t: (b, 0, t)),
                pl.BlockSpec((Ch, C), lambda b, t: (0, 0)),
                pl.BlockSpec((Ch, 1), lambda b, t: (0, 0)),
                pl.BlockSpec((C, Ch), lambda b, t: (0, 0)),
                pl.BlockSpec((C, 1), lambda b, t: (0, 0)),
            ],
            out_specs=pl.BlockSpec((pl.Squeezed(), C, 1), lambda b, t: (b, 0, 0)),
            scratch_shapes=[
                pltpu.VMEM((C, 1), jnp.float32),   # running sum
                pltpu.VMEM((C, 1), jnp.float32),   # running max
            ],
        ),
        compiler_params=pltpu.CompilerParams(
            dimension_semantics=("parallel", "arbitrary"), **vmem_params
        ),
    )(x, w1, b1, w2, b2)

    # ---- Pass 2: out = x * gate ---------------------------------------------
    out = pl.pallas_call(
        _apply_gate_kernel,
        out_shape=jax.ShapeDtypeStruct((B, C, HW), x.dtype),
        grid_spec=pltpu.PrefetchScalarGridSpec(
            num_scalar_prefetch=0,
            grid=(B, n_tiles),
            in_specs=[
                pl.BlockSpec((pl.Squeezed(), C, hw_tile), lambda b, t: (b, 0, t)),
                pl.BlockSpec((pl.Squeezed(), C, 1), lambda b, t: (b, 0, 0)),
            ],
            out_specs=pl.BlockSpec((pl.Squeezed(), C, hw_tile),
                                   lambda b, t: (b, 0, t)),
        ),
        compiler_params=pltpu.CompilerParams(
            dimension_semantics=("parallel", "parallel"), **vmem_params
        ),
    )(x, attn)

    return out.reshape(B, C, H, W)


def reference(x_nchw, w1, b1, w2, b2):
    # Pure-JAX reference matching the PyTorch forward.
    avg = jnp.mean(x_nchw, axis=(2, 3))                      # (B, C)
    mx = jnp.max(x_nchw, axis=(2, 3))                        # (B, C)

    def mlp(v):                                              # v: (B, C)
        h = jnp.maximum(v @ w1.T + b1, 0.0)                  # (B, Ch)
        return h @ w2.T + b2                                 # (B, C)

    attn = jax.nn.sigmoid(mlp(avg) + mlp(mx))                # (B, C)
    return x_nchw * attn[:, :, None, None]


if __name__ == "__main__":
    B, C, H, W = 2, 4, 16, 16
    f = 0.8
    Ch = math.ceil(f * C)  # hidden channels of the squeeze MLP

    key = jax.random.PRNGKey(0)
    kx, kw1, kb1, kw2, kb2 = jax.random.split(key, 5)

    x = jax.random.normal(kx, (B, C, H, W), dtype=jnp.float32)

    # Conv1x1 weights in PyTorch orientation: (out_ch, in_ch), applied as W @ v.
    w1 = jax.random.normal(kw1, (Ch, C), dtype=jnp.float32) * 0.5
    b1 = jax.random.normal(kb1, (Ch, 1), dtype=jnp.float32) * 0.1
    w2 = jax.random.normal(kw2, (C, Ch), dtype=jnp.float32) * 0.5
    b2 = jax.random.normal(kb2, (C, 1), dtype=jnp.float32) * 0.1

    ref = reference(x, w1, b1.reshape(Ch), w2, b2.reshape(C))

    # Fused single-pass path (default at this size).
    out = jax.block_until_ready(channel_attention(x, w1, b1, w2, b2))
    assert out.shape == x.shape
    assert jnp.allclose(out, ref, atol=1e-5, rtol=1e-5), "mismatch (fused)"

    # Forced two-pass path with multi-tile reduction: exercises the tiled
    # sum/max accumulation and the separate gated-multiply pass.
    out_tiled = jax.block_until_ready(
        channel_attention(x, w1, b1, w2, b2, hw_tile=128, force_two_pass=True)
    )
    assert jnp.allclose(out_tiled, ref, atol=1e-5, rtol=1e-5), "mismatch (two-pass)"

    print("KERNEL_OK")
</pallas_src>

<mosaic_0001>
module attributes {stable_mosaic.version = 11 : i64} {
  func.func @_fused_kernel(%arg0: i32, %arg1: memref<1x4x256xf32, #tpu.memory_space<vmem>>, %arg2: memref<4x4xf32, #tpu.memory_space<vmem>>, %arg3: memref<4x1xf32, #tpu.memory_space<vmem>>, %arg4: memref<4x4xf32, #tpu.memory_space<vmem>>, %arg5: memref<4x1xf32, #tpu.memory_space<vmem>>, %arg6: memref<1x4x256xf32, #tpu.memory_space<vmem>>) attributes {dimension_semantics = [#tpu.dimension_semantics<parallel>], iteration_bounds = array<i64: 2>, scalar_prefetch = 0 : i64, scratch_operands = 0 : i64, tpu.core_type = #tpu.core_type<tc>, window_params = [{transform_indices = @transform_0, window_bounds = array<i64: 1, 4, 256>}, {pipeline_mode = #tpu.pipeline_mode<synchronous>, transform_indices = @transform_1, window_bounds = array<i64: 4, 4>}, {pipeline_mode = #tpu.pipeline_mode<synchronous>, transform_indices = @transform_2, window_bounds = array<i64: 4, 1>}, {pipeline_mode = #tpu.pipeline_mode<synchronous>, transform_indices = @transform_3, window_bounds = array<i64: 4, 4>}, {pipeline_mode = #tpu.pipeline_mode<synchronous>, transform_indices = @transform_4, window_bounds = array<i64: 4, 1>}, {transform_indices = @transform_5, window_bounds = array<i64: 1, 4, 256>}]} {
    %c0 = arith.constant 0 : index
    %c0_0 = arith.constant 0 : index
    %c0_1 = arith.constant 0 : index
    %0 = vector.load %arg1[%c0, %c0_0, %c0_1] : memref<1x4x256xf32, #tpu.memory_space<vmem>>, vector<1x4x256xf32>
    %1 = vector.shape_cast %0 : vector<1x4x256xf32> to vector<4x256xf32>
    %cst = arith.constant dense<0.000000e+00> : vector<4xf32>
    %2 = vector.multi_reduction <add>, %1, %cst [1] : vector<4x256xf32> to vector<4xf32>
    %3 = vector.shape_cast %2 : vector<4xf32> to vector<4x1xf32>
    %cst_2 = arith.constant 3.906250e-03 : f32
    %4 = vector.broadcast %cst_2 : f32 to vector<4x1xf32>
    %5 = arith.mulf %3, %4 : vector<4x1xf32>
    %cst_3 = arith.constant dense<0xFF800000> : vector<4xf32>
    %6 = vector.multi_reduction <maximumf>, %1, %cst_3 [1] : vector<4x256xf32> to vector<4xf32>
    %7 = vector.shape_cast %6 : vector<4xf32> to vector<4x1xf32>
    %8 = tpu.iota {dimensions = array<i32: 1>} : vector<4x2xi32>
    %c0_i32 = arith.constant 0 : i32
    %9 = vector.broadcast %c0_i32 : i32 to vector<4x2xi32>
    %10 = arith.cmpi eq, %8, %9 : vector<4x2xi32>
    %11 = vector.shape_cast %5 : vector<4x1xf32> to vector<4x1xf32>
    %12 = vector.broadcast %11 : vector<4x1xf32> to vector<4x2xf32>
    %13 = vector.shape_cast %7 : vector<4x1xf32> to vector<4x1xf32>
    %14 = vector.broadcast %13 : vector<4x1xf32> to vector<4x2xf32>
    %15 = arith.select %10, %12, %14 : vector<4x2xi1>, vector<4x2xf32>
    %c0_4 = arith.constant 0 : index
    %c0_5 = arith.constant 0 : index
    %16 = vector.load %arg2[%c0_4, %c0_5] : memref<4x4xf32, #tpu.memory_space<vmem>>, vector<4x4xf32>
    %c0_6 = arith.constant 0 : index
    %c0_7 = arith.constant 0 : index
    %17 = vector.load %arg3[%c0_6, %c0_7] : memref<4x1xf32, #tpu.memory_space<vmem>>, vector<4x1xf32>
    %c0_8 = arith.constant 0 : index
    %c0_9 = arith.constant 0 : index
    %18 = vector.load %arg4[%c0_8, %c0_9] : memref<4x4xf32, #tpu.memory_space<vmem>>, vector<4x4xf32>
    %c0_10 = arith.constant 0 : index
    %c0_11 = arith.constant 0 : index
    %19 = vector.load %arg5[%c0_10, %c0_11] : memref<4x1xf32, #tpu.memory_space<vmem>>, vector<4x1xf32>
    %cst_12 = arith.constant dense<0.000000e+00> : vector<4x2xf32>
    %20 = tpu.matmul %16, %15, %cst_12 {dimension_numbers = #tpu.dot_dimension_numbers<[1], [0], [0], [1], [0, 0, 1, 1], [], []>} : vector<4x4xf32>, vector<4x2xf32>, vector<4x2xf32> -> vector<4x2xf32>
    %21 = vector.broadcast %17 : vector<4x1xf32> to vector<4x2xf32>
    %22 = arith.addf %20, %21 : vector<4x2xf32>
    %cst_13 = arith.constant 0.000000e+00 : f32
    %23 = vector.broadcast %cst_13 : f32 to vector<4x2xf32>
    %24 = arith.maximumf %22, %23 : vector<4x2xf32>
    %cst_14 = arith.constant dense<0.000000e+00> : vector<4x2xf32>
    %25 = tpu.matmul %18, %24, %cst_14 {dimension_numbers = #tpu.dot_dimension_numbers<[1], [0], [0], [1], [0, 0, 1, 1], [], []>} : vector<4x4xf32>, vector<4x2xf32>, vector<4x2xf32> -> vector<4x2xf32>
    %26 = vector.broadcast %19 : vector<4x1xf32> to vector<4x2xf32>
    %27 = arith.addf %25, %26 : vector<4x2xf32>
    %cst_15 = arith.constant dense<0.000000e+00> : vector<4xf32>
    %28 = vector.multi_reduction <add>, %27, %cst_15 [1] : vector<4x2xf32> to vector<4xf32>
    %29 = vector.shape_cast %28 : vector<4xf32> to vector<4x1xf32>
    %30 = arith.negf %29 : vector<4x1xf32>
    %31 = math.exp %30 : vector<4x1xf32>
    %cst_16 = arith.constant 1.000000e+00 : f32
    %32 = vector.broadcast %cst_16 : f32 to vector<4x1xf32>
    %33 = arith.addf %32, %31 : vector<4x1xf32>
    %34 = arith.divf %32, %33 : vector<4x1xf32>
    %35 = vector.broadcast %34 : vector<4x1xf32> to vector<4x256xf32>
    %36 = arith.mulf %1, %35 : vector<4x256xf32>
    %c0_17 = arith.constant 0 : index
    %c0_18 = arith.constant 0 : index
    %c0_19 = arith.constant 0 : index
    %37 = vector.load %arg6[%c0_17, %c0_18, %c0_19] : memref<1x4x256xf32, #tpu.memory_space<vmem>>, vector<1x4x256xf32>
    %38 = vector.shape_cast %37 : vector<1x4x256xf32> to vector<4x256xf32>
    %39 = vector.shape_cast %36 : vector<4x256xf32> to vector<1x4x256xf32>
    tpu.vector_store %arg6[%c0_17, %c0_18, %c0_19], %39 {strides = array<i32>} : memref<1x4x256xf32, #tpu.memory_space<vmem>>, vector<1x4x256xf32>,
    return
  }
  func.func @transform_0(%arg0: i32) -> (i32, i32, i32) {
    %c0_i32 = arith.constant 0 : i32
    %c0_i32_0 = arith.constant 0 : i32
    %c0_i32_1 = arith.constant 0 : i32
    return %arg0, %c0_i32, %c0_i32_0 : i32, i32, i32
  }
  func.func @transform_1(%arg0: i32) -> (i32, i32) {
    %c0_i32 = arith.constant 0 : i32
    %c0_i32_0 = arith.constant 0 : i32
    %c0_i32_1 = arith.constant 0 : i32
    return %c0_i32, %c0_i32_0 : i32, i32
  }
  func.func @transform_2(%arg0: i32) -> (i32, i32) {
    %c0_i32 = arith.constant 0 : i32
    %c0_i32_0 = arith.constant 0 : i32
    %c0_i32_1 = arith.constant 0 : i32
    return %c0_i32, %c0_i32_0 : i32, i32
  }
  func.func @transform_3(%arg0: i32) -> (i32, i32) {
    %c0_i32 = arith.constant 0 : i32
    %c0_i32_0 = arith.constant 0 : i32
    %c0_i32_1 = arith.constant 0 : i32
    return %c0_i32, %c0_i32_0 : i32, i32
  }
  func.func @transform_4(%arg0: i32) -> (i32, i32) {
    %c0_i32 = arith.constant 0 : i32
    %c0_i32_0 = arith.constant 0 : i32
    %c0_i32_1 = arith.constant 0 : i32
    return %c0_i32, %c0_i32_0 : i32, i32
  }
  func.func @transform_5(%arg0: i32) -> (i32, i32, i32) {
    %c0_i32 = arith.constant 0 : i32
    %c0_i32_0 = arith.constant 0 : i32
    %c0_i32_1 = arith.constant 0 : i32
    return %arg0, %c0_i32, %c0_i32_0 : i32, i32, i32
  }
}

</mosaic_0001>

<llo_original>
// kernel: tpu_custom_call.1
$region0: #{tpu_custom_call.1}
  #allocation0 [shape = 'u32[]', space=smem, size = 0x4, offset = 0x4, fixed_abs, tag = 'smem constant byte address 0x4 - core index']
  #allocation1 [shape = 'u32[144,128]{1,0:T(1,128)}', space=vmem, size = 0x12000, scoped, tag = 'internal scratch']
  %s0 = inlined_call_operand.hbm [shape: f32[2,4,256], index: 0, kind: input, shape index: {}]
  %s1 = inlined_call_operand.vmem [shape: f32[4,4], index: 1, kind: input, shape index: {}]
  %s2 = inlined_call_operand.vmem [shape: f32[4,1], index: 2, kind: input, shape index: {}]
  %s3 = inlined_call_operand.vmem [shape: f32[4,4], index: 3, kind: input, shape index: {}]
  %s4 = inlined_call_operand.vmem [shape: f32[4,1], index: 4, kind: input, shape index: {}]
  %s5 = inlined_call_operand.hbm [shape: f32[2,4,256], index: 5, kind: output, shape index: {}]
  %s6 = sld [smem:[#allocation0]]
  $region57: #{tpu_custom_call.1} parent=0
    _
  %s8 = ssub.s32 1, %s6
  %s9 = scalar_select 0, %s8, %s6
  $region1: #{tpu_custom_call.1} parent=0
    #allocation2 [shape = 'u8[8192]{0}', space=vmem, size = 0x2000, scoped, tag = 'input window, operand 0']
    #allocation3 [shape = 's32[2]{0}', space=sflag, size = 0x8, scoped, tag = 'scoped memory for tpu_custom_call.1']
    #allocation4 [shape = 's32[2]{0}', space=sflag, size = 0x8, scoped, tag = 'scoped memory for tpu_custom_call.1']
    #allocation5 [shape = 'u8[8192]{0}', space=vmem, size = 0x2000, scoped, tag = 'output window, operand 0']
    %10 = vsyncpa [#allocation3], 0
    %s11 = scalar_lea.sflag [#allocation3], 1
    %12 = vsyncpa %s11, 0
    %13 = vsyncpa [#allocation4], 0
    %s14 = scalar_lea.sflag [#allocation4], 1
    %15 = vsyncpa %s14, 0
    loop: start=0, step=1, limit=4
    $region2: #{tpu_custom_call.1} parent=1 // loop_pre_header
      _
    $region3: #{tpu_custom_call.1} parent=1 // loop_header
      %s17 = sphi 0, %s21
      %p18 = scmp.ge.s32.totalorder %s17, 4
      %s27 = sphi 0, %s29
      %s30 = sphi 0, %s27
      %s31 = sphi 0, %s30
      %s47 = sphi 0, %s31
      %s51 = sphi 0, %s51
      %s53 = sphi 0, %s51
      %s54 = sphi 0, %s53
      %s68 = sphi 0, %s54
      %s72 = sphi 0, %s72
      %s74 = sphi 0, %s72
      %s75 = sphi 0, %s74
      %s89 = sphi 0, %s75
      %s93 = sphi 0, %s93
      %s95 = sphi 0, %s93
      %s96 = sphi 0, %s95
      %s110 = sphi 0, %s96
      %s114 = sphi 0, %s114
      %s116 = sphi 0, %s114
      %s117 = sphi 0, %s116
      %s131 = sphi 0, %s117
      %s137 = sphi 0, %s139
      %s140 = sphi 0, %s137
      %s141 = sphi 0, %s140
      %s157 = sphi 0, %s141
    $region4: #{tpu_custom_call.1} parent=1 // loop_header_branch
      %20 = sbr.rel (%p18) target = $region8
    $region5: #{tpu_custom_call.1} parent=1 // loop_body
      %s22 = ssub.s32 %s17, 1
      %s23 = ssub.s32 %s17, 2
      %s24 = sadd.s32 %s17, 1
      %s25 = ssub.s32 %s17, %s24
      %p26 = scmp.eq.s32.totalorder %s25, 0
      %s28 = sadd.s32 %s27, 1
      %s29 = scalar_select %p26, %s27, %s28
      %p32 = pneg %p26
      %p33 = scmp.eq.s32.totalorder %s17, 1
      %p34 = por %p32, %p33
      %p35 = scmp.ne.s32.totalorder %s27, %s30
      %p36 = scmp.eq.s32.totalorder %s17, 0
      %p37 = por %p35, %p36
      %p38 = scmp.ne.s32.totalorder %s27, %s30
      %p39 = scmp.eq.s32.totalorder %s22, 1
      %p40 = por %p38, %p39
      %p41 = scmp.ne.s32.totalorder %s30, %s31
      %p42 = scmp.eq.s32.totalorder %s22, 0
      %p43 = por %p41, %p42
      %p44 = scmp.ne.s32.totalorder %s30, %s31
      %p45 = scmp.eq.s32.totalorder %s23, 1
      %p46 = por %p44, %p45
      %p48 = scmp.ne.s32.totalorder %s31, %s47
      %p49 = scmp.eq.s32.totalorder %s23, 0
      %p50 = por %p48, %p49
      %s52 = sadd.s32 %s51, 1
      %p55 = scmp.eq.s32.totalorder %s17, 1
      %p56 = scmp.ne.s32.totalorder %s51, %s53
      %p57 = scmp.eq.s32.totalorder %s17, 0
      %p58 = por %p56, %p57
      %p59 = scmp.ne.s32.totalorder %s51, %s53
      %p60 = scmp.eq.s32.totalorder %s22, 1
      %p61 = por %p59, %p60
      %p62 = scmp.ne.s32.totalorder %s53, %s54
      %p63 = scmp.eq.s32.totalorder %s22, 0
      %p64 = por %p62, %p63
      %p65 = scmp.ne.s32.totalorder %s53, %s54
      %p66 = scmp.eq.s32.totalorder %s23, 1
      %p67 = por %p65, %p66
      %p69 = scmp.ne.s32.totalorder %s54, %s68
      %p70 = scmp.eq.s32.totalorder %s23, 0
      %p71 = por %p69, %p70
      %s73 = sadd.s32 %s72, 1
      %p76 = scmp.eq.s32.totalorder %s17, 1
      %p77 = scmp.ne.s32.totalorder %s72, %s74
      %p78 = scmp.eq.s32.totalorder %s17, 0
      %p79 = por %p77, %p78
      %p80 = scmp.ne.s32.totalorder %s72, %s74
      %p81 = scmp.eq.s32.totalorder %s22, 1
      %p82 = por %p80, %p81
      %p83 = scmp.ne.s32.totalorder %s74, %s75
      %p84 = scmp.eq.s32.totalorder %s22, 0
      %p85 = por %p83, %p84
      %p86 = scmp.ne.s32.totalorder %s74, %s75
      %p87 = scmp.eq.s32.totalorder %s23, 1
      %p88 = por %p86, %p87
      %p90 = scmp.ne.s32.totalorder %s75, %s89
      %p91 = scmp.eq.s32.totalorder %s23, 0
      %p92 = por %p90, %p91
      %s94 = sadd.s32 %s93, 1
      %p97 = scmp.eq.s32.totalorder %s17, 1
      %p98 = scmp.ne.s32.totalorder %s93, %s95
      %p99 = scmp.eq.s32.totalorder %s17, 0
      %p100 = por %p98, %p99
      %p101 = scmp.ne.s32.totalorder %s93, %s95
      %p102 = scmp.eq.s32.totalorder %s22, 1
      %p103 = por %p101, %p102
      %p104 = scmp.ne.s32.totalorder %s95, %s96
      %p105 = scmp.eq.s32.totalorder %s22, 0
      %p106 = por %p104, %p105
      %p107 = scmp.ne.s32.totalorder %s95, %s96
      %p108 = scmp.eq.s32.totalorder %s23, 1
      %p109 = por %p107, %p108
      %p111 = scmp.ne.s32.totalorder %s96, %s110
      %p112 = scmp.eq.s32.totalorder %s23, 0
      %p113 = por %p111, %p112
      %s115 = sadd.s32 %s114, 1
      %p118 = scmp.eq.s32.totalorder %s17, 1
      %p119 = scmp.ne.s32.totalorder %s114, %s116
      %p120 = scmp.eq.s32.totalorder %s17, 0
      %p121 = por %p119, %p120
      %p122 = scmp.ne.s32.totalorder %s114, %s116
      %p123 = scmp.eq.s32.totalorder %s22, 1
      %p124 = por %p122, %p123
      %p125 = scmp.ne.s32.totalorder %s116, %s117
      %p126 = scmp.eq.s32.totalorder %s22, 0
      %p127 = por %p125, %p126
      %p128 = scmp.ne.s32.totalorder %s116, %s117
      %p129 = scmp.eq.s32.totalorder %s23, 1
      %p130 = por %p128, %p129
      %p132 = scmp.ne.s32.totalorder %s117, %s131
      %p133 = scmp.eq.s32.totalorder %s23, 0
      %p134 = por %p132, %p133
      %s135 = ssub.s32 %s17, %s24
      %p136 = scmp.eq.s32.totalorder %s135, 0
      %s138 = sadd.s32 %s137, 1
      %s139 = scalar_select %p136, %s137, %s138
      %p142 = pneg %p136
      %p143 = scmp.eq.s32.totalorder %s17, 1
      %p144 = por %p142, %p143
      %p145 = scmp.ne.s32.totalorder %s137, %s140
      %p146 = scmp.eq.s32.totalorder %s17, 0
      %p147 = por %p145, %p146
      %p148 = scmp.ne.s32.totalorder %s137, %s140
      %p149 = scmp.eq.s32.totalorder %s22, 1
      %p150 = por %p148, %p149
      %p151 = scmp.ne.s32.totalorder %s140, %s141
      %p152 = scmp.eq.s32.totalorder %s22, 0
      %p153 = por %p151, %p152
      %p154 = scmp.ne.s32.totalorder %s140, %s141
      %p155 = scmp.eq.s32.totalorder %s23, 1
      %p156 = por %p154, %p155
      %p158 = scmp.ne.s32.totalorder %s141, %s157
      %p159 = scmp.eq.s32.totalorder %s23, 0
      %p160 = por %p158, %p159
      %p161 = scmp.le.s32.totalorder 1, %s17
      %p162 = scmp.lt.s32.totalorder %s17, 3
      %p163 = pnand %p161, %p162
      %p164 = pneg %p163
      // Predicated region
      $region9: #{tpu_custom_call.1} parent=5 // pred_check
        _
      $region10: #{tpu_custom_call.1} parent=5 // pred_check_branch
        %166 = sbr.rel (%p163) target = $region12
      $region11: #{tpu_custom_call.1} parent=5 // pred_region
        %s167 = ssub.s32 %s17, 1
        // Predicated region
        $region13: #{tpu_custom_call.1} parent=11 // pred_check
          %p168 = pneg %p64
        $region14: #{tpu_custom_call.1} parent=11 // pred_check_branch
          %170 = sbr.rel (%p168) target = $region16
        $region15: #{tpu_custom_call.1} parent=11 // pred_region
          _
        $region16: #{tpu_custom_call.1} parent=11 // pred_fallthru
          _
        // Predicated region
        $region17: #{tpu_custom_call.1} parent=11 // pred_check
          %p171 = pneg %p85
        $region18: #{tpu_custom_call.1} parent=11 // pred_check_branch
          %173 = sbr.rel (%p171) target = $region20
        $region19: #{tpu_custom_call.1} parent=11 // pred_region
          _
        $region20: #{tpu_custom_call.1} parent=11 // pred_fallthru
          _
        // Predicated region
        $region21: #{tpu_custom_call.1} parent=11 // pred_check
          %p174 = pneg %p106
        $region22: #{tpu_custom_call.1} parent=11 // pred_check_branch
          %176 = sbr.rel (%p174) target = $region24
        $region23: #{tpu_custom_call.1} parent=11 // pred_region
          _
        $region24: #{tpu_custom_call.1} parent=11 // pred_fallthru
          _
        // Predicated region
        $region25: #{tpu_custom_call.1} parent=11 // pred_check
          %p177 = pneg %p127
        $region26: #{tpu_custom_call.1} parent=11 // pred_check_branch
          %179 = sbr.rel (%p177) target = $region28
        $region27: #{tpu_custom_call.1} parent=11 // pred_region
          _
        $region28: #{tpu_custom_call.1} parent=11 // pred_fallthru
          _
      $region12: #{tpu_custom_call.1} parent=5 // pred_fallthru
        _
      %p180 = scmp.lt.s32.totalorder %s17, 2
      // Predicated region
      $region29: #{tpu_custom_call.1} parent=5 // pred_check
        %p181 = pneg %p180
      $region30: #{tpu_custom_call.1} parent=5 // pred_check_branch
        %183 = sbr.rel (%p181) target = $region32
      $region31: #{tpu_custom_call.1} parent=5 // pred_region
        // Predicated region
        $region33: #{tpu_custom_call.1} parent=31 // pred_check
          %p184 = pneg %p37
        $region34: #{tpu_custom_call.1} parent=31 // pred_check_branch
          %186 = sbr.rel (%p184) target = $region36
        $region35: #{tpu_custom_call.1} parent=31 // pred_region
          %s187 = sand.u32 %s27, 1
          %s188 = scalar_lea.sflag [#allocation3], %s187
          %s189 = sand.u32 %s27, 1
          %s190 = smul.addr %s189, 8
          %s191 = scalar_lea.vmem [#allocation2], %s190
          %s193 = ssub.s32 128, 128
          %194 = vsyncadd %s188, %s193
          %s195 = smul.addr %s17, 2
          %s196 = smul.addr %s195, 64
          %s197 = scalar_lea.hbm %s0, %s196
          %s199 = sshll.u32 %s191, 4
          %s200 = int_to_ptr.vmem [resolvable:$true] %s199
          %202 = dma.hbm_to_vmem [thread:$0]  %s197, 128, %s200, %s188
        $region36: #{tpu_custom_call.1} parent=31 // pred_fallthru
          _
      $region32: #{tpu_custom_call.1} parent=5 // pred_fallthru
        _
      %p203 = scmp.le.s32.totalorder 1, %s17
      %p204 = scmp.lt.s32.totalorder %s17, 3
      %p205 = pnand %p203, %p204
      %p206 = pneg %p205
      // Predicated region
      $region37: #{tpu_custom_call.1} parent=5 // pred_check
        _
      $region38: #{tpu_custom_call.1} parent=5 // pred_check_branch
        %208 = sbr.rel (%p205) target = $region40
      $region39: #{tpu_custom_call.1} parent=5 // pred_region
        %s209 = ssub.s32 %s17, 1
        %s210 = sand.u32 %s30, 1
        %s211 = scalar_lea.sflag [#allocation3], %s210
        %s212 = sand.u32 %s30, 1
        %s213 = smul.addr %s212, 8
        %s214 = scalar_lea.vmem [#allocation2], %s213
        // Predicated region
        $region41: #{tpu_custom_call.1} parent=39 // pred_check
          %p215 = pneg %p43
        $region42: #{tpu_custom_call.1} parent=39 // pred_check_branch
          %217 = sbr.rel (%p215) target = $region44
        $region43: #{tpu_custom_call.1} parent=39 // pred_region
          %218 = dma.done %s211, 128
        $region44: #{tpu_custom_call.1} parent=39 // pred_fallthru
          _
        %s219 = sand.u32 %s30, 1
        %s220 = scalar_lea.sflag [#allocation3], %s219
        %s221 = sand.u32 %s30, 1
        %s222 = smul.addr %s221, 8
        %s223 = scalar_lea.vmem [#allocation2], %s222
        %p224 = pneg %p43
        %p225 = pneg %p40
        %p226 = pneg %p64
        %p227 = pneg %p61
        %p228 = pneg %p85
        %p229 = pneg %p82
        %p230 = pneg %p106
        %p231 = pneg %p103
        %p232 = pneg %p127
        %p233 = pneg %p124
        %p234 = pneg %p153
        %p235 = pneg %p150
        %s236 = sand.u32 %s140, 1
        %s237 = scalar_lea.sflag [#allocation4], %s236
        %s238 = sand.u32 %s140, 1
        %s239 = smul.addr %s238, 8
        %s240 = scalar_lea.vmem [#allocation5], %s239
        %v241 = vld [vmem:[%s214] sm:$0xff]
        %v243 = vcombine.high %v241, %v241
        %vm245 = vcmask 1043456
        %v246 = vsel %vm245, %v241, 0.0
        %v247 = vsel %vm245, %v243, 0.0
        %v248 = vadd.f32 %v246, %v247
        %249 = vadd.xlane.f32.xlu0 %v248
        %v250 = vpop.xlane.xlu0 %249
        %v251 = vmul.f32 %v250, 0.00390625
        %v252 = vsel %vm245, %v241, -inf
        %v253 = vsel %vm245, %v243, -inf
        %v254 = vmax.f32 %v252, %v253
        %255 = vmax.xlane.f32.xlu0 %v254
        %v256 = vpop.xlane.xlu0 %255
        %v257 = vlaneseq
        %v258 = vand.u32 %v257, 127
        %vm259 = vcmp.eq.s32.totalorder %v258, 0
        %v260 = vsel %vm259, %v251, %v256
        %v261 = vld [vmem:[%s1] sm:$0xf]
        %v262 = vld [vmem:[%s2] sm:$0xf]
        %v263 = vld [vmem:[%s3] sm:$0xf]
        %v264 = vld [vmem:[%s4] sm:$0xf]
        %266 = vset.pattern.permute.xlu0 0
        %267 = vperm.xlu0 %266, %v262
        %v268 = vpop.permute.xlu0 %267
        %vm270 = vcmask 31744
        %v272 = vsel %vm270, %v261, 0
        %v275 = vsel %vm245, %v260, 0
        %277 = vmatprep.subr.mxu0 0.0
        %278 = vmatpush1.msra.mxu0 0.0
        %279 = vmatprep.subr.mxu0 0.0
        %280 = vmatpush1.msra.mxu0 0.0
        %281 = vmatprep.subr.mxu0 0.0
        %282 = vmatpush1.msra.mxu0 0.0
        %283 = vmatprep.subr.mxu0 0.0
        %284 = vmatpush1.msra.mxu0 0.0
        %285 = vmatprep.subr.mxu0 0.0
        %286 = vmatpush1.msra.mxu0 0.0
        %287 = vmatprep.subr.mxu0 0.0
        %288 = vmatpush1.msra.mxu0 0.0
        %289 = vmatprep.subr.mxu0 0.0
        %290 = vmatpush1.msra.mxu0 0.0
        %291 = vmatprep.subr.mxu0 0.0
        %292 = vmatpush1.msra.mxu0 0.0
        %293 = vmatprep.subr.mxu0 0.0
        %294 = vmatpush1.msra.mxu0 0.0
        %295 = vmatprep.subr.mxu0 0.0
        %296 = vmatpush1.msra.mxu0 0.0
        %297 = vmatprep.subr.mxu0 0.0
        %298 = vmatpush1.msra.mxu0 0.0
        %299 = vmatprep.subr.mxu0 0.0
        %300 = vmatpush1.msra.mxu0 0.0
        %301 = vmatprep.subr.mxu0 0.0
        %302 = vmatpush1.msra.mxu0 0.0
        %303 = vmatprep.subr.mxu0 0.0
        %304 = vmatpush1.msra.mxu0 0.0
        %305 = vmatprep.subr.mxu0 0.0
        %306 = vmatpush1.msra.mxu0 0.0
        %307 = vmatprep.subr.mxu0 0.0
        %308 = vmatpush1.msra.mxu0 %v275
        %309 = vmatprep.subr.mxu0 0.0
        %310 = vmatpush2.msra.mxu0 0.0
        %311 = vmatprep.subr.mxu0 0.0
        %312 = vmatpush2.msra.mxu0 0.0
        %313 = vmatprep.subr.mxu0 0.0
        %314 = vmatpush2.msra.mxu0 0.0
        %315 = vmatprep.subr.mxu0 0.0
        %316 = vmatpush2.msra.mxu0 0.0
        %317 = vmatprep.subr.mxu0 0.0
        %318 = vmatpush2.msra.mxu0 0.0
        %319 = vmatprep.subr.mxu0 0.0
        %320 = vmatpush2.msra.mxu0 0.0
        %321 = vmatprep.subr.mxu0 0.0
        %322 = vmatpush2.msra.mxu0 0.0
        %323 = vmatprep.subr.mxu0 0.0
        %324 = vmatpush2.msra.mxu0 0.0
        %325 = vmatprep.subr.mxu0 0.0
        %326 = vmatpush2.msra.mxu0 0.0
        %327 = vmatprep.subr.mxu0 0.0
        %328 = vmatpush2.msra.mxu0 0.0
        %329 = vmatprep.subr.mxu0 0.0
        %330 = vmatpush2.msra.mxu0 0.0
        %331 = vmatprep.subr.mxu0 0.0
        %332 = vmatpush2.msra.mxu0 0.0
        %333 = vmatprep.subr.mxu0 0.0
        %334 = vmatpush2.msra.mxu0 0.0
        %335 = vmatprep.subr.mxu0 0.0
        %336 = vmatpush2.msra.mxu0 0.0
        %337 = vmatprep.subr.mxu0 0.0
        %338 = vmatpush2.msra.mxu0 0.0
        %339 = vmatprep.subr.mxu0 0.0
        %340 = vmatpush2.msra.mxu0 0.0
        %341 = vmatprep.mubr.f32.mxu0 0.0
        %342 = vmatmul.mubr.f32.gmra.mxu0 %v272
        %v343 = vpop.f32.mrf.mxu0
        %v344 = vadd.f32 %v268, %v343
        %v345 = vpop.f32.mrf.mxu0
        %346 = vdwg.mxu0
        %v347 = vmax.f32 %v344, 0.0
        %349 = vset.pattern.permute.xlu0 0
        %350 = vperm.xlu0 %349, %v264
        %v351 = vpop.permute.xlu0 %350
        %v354 = vsel %vm270, %v263, 0
        %v357 = vsel %vm245, %v347, 0
        %359 = vmatprep.subr.mxu0 0.0
        %360 = vmatpush1.msra.mxu0 0.0
        %361 = vmatprep.subr.mxu0 0.0
        %362 = vmatpush1.msra.mxu0 0.0
        %363 = vmatprep.subr.mxu0 0.0
        %364 = vmatpush1.msra.mxu0 0.0
        %365 = vmatprep.subr.mxu0 0.0
        %366 = vmatpush1.msra.mxu0 0.0
        %367 = vmatprep.subr.mxu0 0.0
        %368 = vmatpush1.msra.mxu0 0.0
        %369 = vmatprep.subr.mxu0 0.0
        %370 = vmatpush1.msra.mxu0 0.0
        %371 = vmatprep.subr.mxu0 0.0
        %372 = vmatpush1.msra.mxu0 0.0
        %373 = vmatprep.subr.mxu0 0.0
        %374 = vmatpush1.msra.mxu0 0.0
        %375 = vmatprep.subr.mxu0 0.0
        %376 = vmatpush1.msra.mxu0 0.0
        %377 = vmatprep.subr.mxu0 0.0
        %378 = vmatpush1.msra.mxu0 0.0
        %379 = vmatprep.subr.mxu0 0.0
        %380 = vmatpush1.msra.mxu0 0.0
        %381 = vmatprep.subr.mxu0 0.0
        %382 = vmatpush1.msra.mxu0 0.0
        %383 = vmatprep.subr.mxu0 0.0
        %384 = vmatpush1.msra.mxu0 0.0
        %385 = vmatprep.subr.mxu0 0.0
        %386 = vmatpush1.msra.mxu0 0.0
        %387 = vmatprep.subr.mxu0 0.0
        %388 = vmatpush1.msra.mxu0 0.0
        %389 = vmatprep.subr.mxu0 0.0
        %390 = vmatpush1.msra.mxu0 %v357
        %391 = vmatprep.subr.mxu0 0.0
        %392 = vmatpush2.msra.mxu0 0.0
        %393 = vmatprep.subr.mxu0 0.0
        %394 = vmatpush2.msra.mxu0 0.0
        %395 = vmatprep.subr.mxu0 0.0
        %396 = vmatpush2.msra.mxu0 0.0
        %397 = vmatprep.subr.mxu0 0.0
        %398 = vmatpush2.msra.mxu0 0.0
        %399 = vmatprep.subr.mxu0 0.0
        %400 = vmatpush2.msra.mxu0 0.0
        %401 = vmatprep.subr.mxu0 0.0
        %402 = vmatpush2.msra.mxu0 0.0
        %403 = vmatprep.subr.mxu0 0.0
        %404 = vmatpush2.msra.mxu0 0.0
        %405 = vmatprep.subr.mxu0 0.0
        %406 = vmatpush2.msra.mxu0 0.0
        %407 = vmatprep.subr.mxu0 0.0
        %408 = vmatpush2.msra.mxu0 0.0
        %409 = vmatprep.subr.mxu0 0.0
        %410 = vmatpush2.msra.mxu0 0.0
        %411 = vmatprep.subr.mxu0 0.0
        %412 = vmatpush2.msra.mxu0 0.0
        %413 = vmatprep.subr.mxu0 0.0
        %414 = vmatpush2.msra.mxu0 0.0
        %415 = vmatprep.subr.mxu0 0.0
        %416 = vmatpush2.msra.mxu0 0.0
        %417 = vmatprep.subr.mxu0 0.0
        %418 = vmatpush2.msra.mxu0 0.0
        %419 = vmatprep.subr.mxu0 0.0
        %420 = vmatpush2.msra.mxu0 0.0
        %421 = vmatprep.subr.mxu0 0.0
        %422 = vmatpush2.msra.mxu0 0.0
        %423 = vmatprep.mubr.f32.mxu0 0.0
        %424 = vmatmul.mubr.f32.gmra.mxu0 %v354
        %v425 = vpop.f32.mrf.mxu0
        %v426 = vadd.f32 %v351, %v425
        %v427 = vpop.f32.mrf.mxu0
        %428 = vdwg.mxu0
        %vm429 = vcmask 11264
        %v430 = vsel %vm429, %v426, 0.0
        %431 = vadd.xlane.f32.xlu0 %v430
        %v432 = vpop.xlane.xlu0 %431
        %v433 = vxor.u32 %v432, 2147483648
        %v434 = vmul.f32 %v433, 1.442695
        %v435 = vpow.pop %v434
        %v436 = vadd.f32 %v435, 1.0
        %v437 = vrcp.pop %v436
        %v438 = vmul.f32 1.0, %v437
        %v441 = vunpack.c.l.s4 839922192
        %v442 = vunpack.c.0.s8 %v441
        %v443 = vlaneseq
        %v444 = vshrl.u32 %v443, 7
        %v445 = vsub.s32 %v442, %v444
        %v446 = vrot.slane %v438, %v445
        %v448 = vmul.f32 %v241, %v446
        %449 = vst [vmem:[%s240] sm:$0xff] %v448
        %s450 = sand.u32 %s140, 1
        %s451 = scalar_lea.sflag [#allocation4], %s450
        %s452 = sand.u32 %s140, 1
        %s453 = smul.addr %s452, 8
        %s454 = scalar_lea.vmem [#allocation5], %s453
        // Predicated region
        $region45: #{tpu_custom_call.1} parent=39 // pred_check
          %p455 = pneg %p150
        $region46: #{tpu_custom_call.1} parent=39 // pred_check_branch
          %457 = sbr.rel (%p455) target = $region48
        $region47: #{tpu_custom_call.1} parent=39 // pred_region
          %s459 = ssub.s32 128, 128
          %460 = vsyncadd %s451, %s459
          %s461 = smul.addr %s22, 2
          %s462 = smul.addr %s461, 64
          %s463 = scalar_lea.hbm %s5, %s462
          %s465 = sshll.u32 %s454, 4
          %s466 = int_to_ptr.vmem [resolvable:$true] %s465
          %468 = dma.vmem_to_hbm [thread:$0]  %s466, 128, %s463, %s451
        $region48: #{tpu_custom_call.1} parent=39 // pred_fallthru
          _
      $region40: #{tpu_custom_call.1} parent=5 // pred_fallthru
        _
      %p469 = scmp.le.s32.totalorder 2, %s17
      // Predicated region
      $region49: #{tpu_custom_call.1} parent=5 // pred_check
        %p470 = pneg %p469
      $region50: #{tpu_custom_call.1} parent=5 // pred_check_branch
        %472 = sbr.rel (%p470) target = $region52
      $region51: #{tpu_custom_call.1} parent=5 // pred_region
        %s473 = ssub.s32 %s17, 2
        // Predicated region
        $region53: #{tpu_custom_call.1} parent=51 // pred_check
          %p474 = pneg %p156
        $region54: #{tpu_custom_call.1} parent=51 // pred_check_branch
          %476 = sbr.rel (%p474) target = $region56
        $region55: #{tpu_custom_call.1} parent=51 // pred_region
          %s477 = sand.u32 %s141, 1
          %s478 = scalar_lea.sflag [#allocation4], %s477
          %s479 = sand.u32 %s141, 1
          %s480 = smul.addr %s479, 8
          %s481 = scalar_lea.vmem [#allocation5], %s480
          %482 = dma.done %s478, 128
        $region56: #{tpu_custom_call.1} parent=51 // pred_fallthru
          _
      $region52: #{tpu_custom_call.1} parent=5 // pred_fallthru
        _
    $region6: #{tpu_custom_call.1} parent=1 // loop_footer
      %s21 = sadd.s32 1, %s17
    $region7: #{tpu_custom_call.1} parent=1 // loop_footer_branch
      %16 = sbr.rel target = $region3
    $region8: #{tpu_custom_call.1} parent=1 // loop_exit
      _
    %483 = vsyncpa [#allocation3], 1
    %s484 = scalar_lea.sflag [#allocation3], 1
    %485 = vsyncpa %s484, 1
    %486 = vsyncpa [#allocation4], 1
    %s487 = scalar_lea.sflag [#allocation4], 1
    %488 = vsyncpa %s487, 1

</llo_original>
